<compile_context>
chip_gen: v7x
topology: tpu7x:2x2x1
jax: 0.10.0
libtpu: 0.0.40
codegen_flags: <defaults>
</compile_context>

<pallas_src>
import functools

import jax
import jax.numpy as jnp
from jax.experimental import pallas as pl
from jax.experimental.pallas import tpu as pltpu


def _round_up(x, m):
    return (x + m - 1) // m * m


def _select_tile_b(B, max_tile_b, min_grid=2):
    """Pick the batch tile: big for DMA/step-overhead amortization, but with
    >= min_grid grid steps so v7x's two TensorCores both get work."""
    if B <= 128:
        return B                                   # single full-array block
    tile = min(max_tile_b, _round_up(B, 128))
    if pl.cdiv(B, tile) < min_grid:                # mid-sized batch: split it
        tile = max(128, _round_up(pl.cdiv(B, min_grid), 128))
    return tile


def reward_kernel(x_ref, w1_ref, b1_ref, w2_ref, b2_ref, o_ref):
    # fc1 on the MXU with f32 accumulation (K = 230 tail masked by Mosaic),
    # bias + ReLU on the VPU.
    h = jnp.dot(x_ref[...], w1_ref[...], preferred_element_type=jnp.float32)
    h = jnp.maximum(h + b1_ref[...], 0.0)                 # (tile_b, HID_pad)
    # fc2 as VPU multiply + cross-lane (XLU) reduction: avoids a second MXU
    # matmul whose output would use 1 of 128/256 columns.
    r = jnp.sum(h * w2_ref[...], axis=-1) + b2_ref[0]     # (tile_b,)
    # Lane-dense store: reward laid out along the 128-lane axis.
    o_ref[...] = r[None, :].astype(o_ref.dtype)           # (1, tile_b)


def prepare_params(w1, b1, w2, b2, *, use_bf16=False):
    """One-time parameter prep (hoisted out of the per-call forward).

    Pads only the hidden (N) axis 200 -> 256; K stays 230 (unpadded).  The
    padded hidden units have zero w1 column / zero b1 / zero w2, so the math
    is exact.  With use_bf16=True the streamed operand w1 is stored in bf16
    (x should then be fed in bf16 too); b1/w2/b2 stay f32.
    """
    IN, HID = w1.shape
    HID_pad = _round_up(HID, 128)
    stream_dt = jnp.bfloat16 if use_bf16 else jnp.float32
    f32 = jnp.float32
    w1_p = jnp.zeros((IN, HID_pad), stream_dt).at[:, :HID].set(
        w1.astype(stream_dt))
    b1_p = jnp.zeros((1, HID_pad), f32).at[:, :HID].set(
        b1.astype(f32).reshape(1, HID))
    w2_p = jnp.zeros((1, HID_pad), f32).at[:, :HID].set(
        w2.astype(f32).reshape(1, HID))
    b2_p = b2.astype(f32).reshape(1)                      # SMEM scalar
    return w1_p, b1_p, w2_p, b2_p


@functools.partial(jax.jit, static_argnames=("max_tile_b",))
def reward_model_forward(x, params, *, max_tile_b=2048):
    w1_p, b1_p, w2_p, b2_p = params
    B, IN = x.shape
    HID_pad = w1_p.shape[1]

    # Stream dtype follows the prepared weights (pass x already in bf16 to
    # avoid an extra HBM convert pass when use_bf16=True).
    x = x.astype(w1_p.dtype)

    tile_b = _select_tile_b(B, max_tile_b)
    grid_b = pl.cdiv(B, tile_b)
    out_cols = grid_b * tile_b          # only the OUTPUT is padded (cheap)

    cost = pl.CostEstimate(
        flops=2 * B * IN * HID_pad + 3 * B * HID_pad,
        transcendentals=0,
        bytes_accessed=(x.size * x.dtype.itemsize
                        + w1_p.size * w1_p.dtype.itemsize
                        + (b1_p.size + w2_p.size + b2_p.size) * 4
                        + B * 4),
    )

    out = pl.pallas_call(
        reward_kernel,
        out_shape=jax.ShapeDtypeStruct((1, out_cols), jnp.float32),
        grid=(grid_b,),
        in_specs=[
            # x streams block-by-block straight from the unpadded HBM array.
            pl.BlockSpec((tile_b, IN), lambda i: (i, 0)),
            # Weights / biases: constant index_map -> VMEM-resident across grid.
            pl.BlockSpec((IN, HID_pad), lambda i: (0, 0)),
            pl.BlockSpec((1, HID_pad), lambda i: (0, 0)),
            pl.BlockSpec((1, HID_pad), lambda i: (0, 0)),
            # b2: single scalar in SMEM (no padded VMEM tile, no vector load).
            pl.BlockSpec(memory_space=pltpu.MemorySpace.SMEM),
        ],
        out_specs=pl.BlockSpec((1, tile_b), lambda i: (0, i)),
        compiler_params=pltpu.CompilerParams(
            dimension_semantics=("parallel",),   # batch axis -> both v7x TCs
        ),
        cost_estimate=cost,
    )(x, w1_p, b1_p, w2_p, b2_p)

    out = out[0, :B]
    # torch .squeeze(): drops all size-1 dims (scalar if B == 1).
    return jnp.squeeze(out)


def init_params(key, det_sz=200, stoc_sz=30):
    # Deterministic synthetic init (PyTorch-Linear-style uniform bounds).
    in1 = det_sz + stoc_sz
    k1, k2, k3, k4 = jax.random.split(key, 4)
    bound1 = 1.0 / jnp.sqrt(in1)
    bound2 = 1.0 / jnp.sqrt(det_sz)
    w1 = jax.random.uniform(k1, (in1, det_sz), jnp.float32, -bound1, bound1)
    b1 = jax.random.uniform(k2, (1, det_sz), jnp.float32, -bound1, bound1)
    w2 = jax.random.uniform(k3, (det_sz, 1), jnp.float32, -bound2, bound2)
    b2 = jax.random.uniform(k4, (1, 1), jnp.float32, -bound2, bound2)
    return w1, b1, w2, b2


if __name__ == "__main__":
    det_sz, stoc_sz, batch = 200, 30, 8
    key = jax.random.PRNGKey(0)
    kx, kp = jax.random.split(key)
    x = jax.random.normal(kx, (batch, det_sz + stoc_sz), jnp.float32)
    w1, b1, w2, b2 = init_params(kp, det_sz, stoc_sz)

    # Pure-JAX reference of the same math.
    ref = jnp.squeeze(jnp.maximum(x @ w1 + b1, 0.0) @ w2 + b2)

    # Exact-f32 path (torch numerics parity).
    params_f32 = prepare_params(w1, b1, w2, b2, use_bf16=False)
    out = jax.block_until_ready(reward_model_forward(x, params_f32))
    assert out.shape == (batch,), out.shape
    assert jnp.allclose(out, ref, atol=1e-4, rtol=1e-4)

    # bf16-stream path (halves HBM bytes; f32 accumulation) -> loose tolerance.
    params_bf16 = prepare_params(w1, b1, w2, b2, use_bf16=True)
    out_bf16 = jax.block_until_ready(
        reward_model_forward(x.astype(jnp.bfloat16), params_bf16))
    assert out_bf16.shape == (batch,), out_bf16.shape
    assert jnp.allclose(out_bf16, ref, atol=5e-2, rtol=5e-2)

    print("KERNEL_OK")
</pallas_src>

<mosaic_0001>
module attributes {stable_mosaic.version = 11 : i64} {
  func.func @reward_kernel(%arg0: i32, %arg1: memref<8x230xf32, #tpu.memory_space<vmem>>, %arg2: memref<230x256xf32, #tpu.memory_space<vmem>>, %arg3: memref<1x256xf32, #tpu.memory_space<vmem>>, %arg4: memref<1x256xf32, #tpu.memory_space<vmem>>, %arg5: memref<1xf32, #tpu.memory_space<smem>>, %arg6: memref<1x8xf32, #tpu.memory_space<vmem>>) attributes {dimension_semantics = [#tpu.dimension_semantics<parallel>], iteration_bounds = array<i64: 1>, scalar_prefetch = 0 : i64, scratch_operands = 0 : i64, tpu.core_type = #tpu.core_type<tc>, window_params = [{transform_indices = @transform_0, window_bounds = array<i64: 8, 230>}, {pipeline_mode = #tpu.pipeline_mode<synchronous>, transform_indices = @transform_1, window_bounds = array<i64: 230, 256>}, {pipeline_mode = #tpu.pipeline_mode<synchronous>, transform_indices = @transform_2, window_bounds = array<i64: 1, 256>}, {pipeline_mode = #tpu.pipeline_mode<synchronous>, transform_indices = @transform_3, window_bounds = array<i64: 1, 256>}, {transform_indices = @transform_4, window_bounds = array<i64: 1>}, {transform_indices = @transform_5, window_bounds = array<i64: 1, 8>}]} {
    %c0 = arith.constant 0 : index
    %c0_0 = arith.constant 0 : index
    %0 = vector.load %arg1[%c0, %c0_0] : memref<8x230xf32, #tpu.memory_space<vmem>>, vector<8x230xf32>
    %c0_1 = arith.constant 0 : index
    %c0_2 = arith.constant 0 : index
    %1 = vector.load %arg2[%c0_1, %c0_2] : memref<230x256xf32, #tpu.memory_space<vmem>>, vector<230x256xf32>
    %cst = arith.constant dense<0.000000e+00> : vector<8x256xf32>
    %2 = tpu.matmul %0, %1, %cst {dimension_numbers = #tpu.dot_dimension_numbers<[1], [0], [0], [1], [0, 0, 1, 1], [], []>} : vector<8x230xf32>, vector<230x256xf32>, vector<8x256xf32> -> vector<8x256xf32>
    %c0_3 = arith.constant 0 : index
    %c0_4 = arith.constant 0 : index
    %3 = vector.load %arg3[%c0_3, %c0_4] : memref<1x256xf32, #tpu.memory_space<vmem>>, vector<1x256xf32>
    %4 = vector.broadcast %3 : vector<1x256xf32> to vector<8x256xf32>
    %5 = arith.addf %2, %4 : vector<8x256xf32>
    %cst_5 = arith.constant 0.000000e+00 : f32
    %6 = vector.broadcast %cst_5 : f32 to vector<8x256xf32>
    %7 = arith.maximumf %5, %6 : vector<8x256xf32>
    %c0_6 = arith.constant 0 : index
    %c0_7 = arith.constant 0 : index
    %8 = vector.load %arg4[%c0_6, %c0_7] : memref<1x256xf32, #tpu.memory_space<vmem>>, vector<1x256xf32>
    %9 = vector.broadcast %8 : vector<1x256xf32> to vector<8x256xf32>
    %10 = arith.mulf %7, %9 : vector<8x256xf32>
    %cst_8 = arith.constant dense<0.000000e+00> : vector<8xf32>
    %11 = vector.multi_reduction <add>, %10, %cst_8 [1] : vector<8x256xf32> to vector<8xf32>
    %c0_9 = arith.constant 0 : index
    %12 = memref.load %arg5[%c0_9] : memref<1xf32, #tpu.memory_space<smem>>
    %13 = vector.broadcast %12 : f32 to vector<8xf32>
    %14 = arith.addf %11, %13 : vector<8xf32>
    %15 = vector.shape_cast %14 : vector<8xf32> to vector<1x8xf32>
    %c0_10 = arith.constant 0 : index
    %c0_11 = arith.constant 0 : index
    %16 = vector.load %arg6[%c0_10, %c0_11] : memref<1x8xf32, #tpu.memory_space<vmem>>, vector<1x8xf32>
    tpu.vector_store %arg6[%c0_10, %c0_11], %15 {strides = array<i32>} : memref<1x8xf32, #tpu.memory_space<vmem>>, vector<1x8xf32>,
    return
  }
  func.func @transform_0(%arg0: i32) -> (i32, i32) {
    %c0_i32 = arith.constant 0 : i32
    %c0_i32_0 = arith.constant 0 : i32
    return %arg0, %c0_i32 : i32, i32
  }
  func.func @transform_1(%arg0: i32) -> (i32, i32) {
    %c0_i32 = arith.constant 0 : i32
    %c0_i32_0 = arith.constant 0 : i32
    %c0_i32_1 = arith.constant 0 : i32
    return %c0_i32, %c0_i32_0 : i32, i32
  }
  func.func @transform_2(%arg0: i32) -> (i32, i32) {
    %c0_i32 = arith.constant 0 : i32
    %c0_i32_0 = arith.constant 0 : i32
    %c0_i32_1 = arith.constant 0 : i32
    return %c0_i32, %c0_i32_0 : i32, i32
  }
  func.func @transform_3(%arg0: i32) -> (i32, i32) {
    %c0_i32 = arith.constant 0 : i32
    %c0_i32_0 = arith.constant 0 : i32
    %c0_i32_1 = arith.constant 0 : i32
    return %c0_i32, %c0_i32_0 : i32, i32
  }
  func.func @transform_4(%arg0: i32) -> i32 {
    %c0_i32 = arith.constant 0 : i32
    %c0_i32_0 = arith.constant 0 : i32
    return %c0_i32 : i32
  }
  func.func @transform_5(%arg0: i32) -> (i32, i32) {
    %c0_i32 = arith.constant 0 : i32
    %c0_i32_0 = arith.constant 0 : i32
    return %c0_i32, %arg0 : i32, i32
  }
}

</mosaic_0001>

<llo_original>
// kernel: reward_model_forward.1
$region0: #{reward_model_forward.1}
  #allocation0 [shape = 'u32[]', space=smem, size = 0x4, offset = 0x4, fixed_abs, tag = 'smem constant byte address 0x4 - core index']
  #allocation1 [shape = 'u32[144,128]{1,0:T(1,128)}', space=vmem, size = 0x12000, scoped, tag = 'internal scratch']
  #allocation2 [shape = 'f32[1]{0:T(128)S(6)}', space=smem, size = 0x200, scoped, tag = 'scoped memory for reward_model_forward.1']
  %s0 = inlined_call_operand.hbm [shape: f32[8,230], index: 0, kind: input, shape index: {}]
  %s1 = inlined_call_operand.hbm [shape: f32[230,256], index: 1, kind: input, shape index: {}]
  %s2 = inlined_call_operand.vmem [shape: f32[1,256], index: 2, kind: input, shape index: {}]
  %s3 = inlined_call_operand.vmem [shape: f32[1,256], index: 3, kind: input, shape index: {}]
  %s4 = inlined_call_operand.<no memory space> [shape: f32[1], index: 4, kind: input, shape index: {}]
  %s5 = inlined_call_operand.hbm [shape: f32[1,8], index: 5, kind: output, shape index: {}]
  %s6 = sld [smem:[#allocation0]]
  $region38: #{reward_model_forward.1} parent=0
    _
  %s8 = ssub.s32 1, %s6
  %s9 = scalar_select 0, %s8, %s6
  %10 = sst [smem:[#allocation2]] %s4
  $region1: #{reward_model_forward.1} parent=0
    #allocation3 [shape = 'u8[8192]{0}', space=vmem, size = 0x2000, scoped, tag = 'input window, operand 0, single buffered']
    #allocation4 [shape = 's32[1]{0}', space=sflag, size = 0x4, scoped, tag = 'scoped memory for reward_model_forward.1']
    #allocation5 [shape = 's32[1]{0}', space=sflag, size = 0x4, scoped, tag = 'scoped memory for reward_model_forward.1']
    #allocation6 [shape = 'u8[237568]{0}', space=vmem, size = 0x3a000, scoped, tag = 'input window, operand 1, single buffered']
    #allocation7 [shape = 's32[1]{0}', space=sflag, size = 0x4, scoped, tag = 'scoped memory for reward_model_forward.1']
    #allocation8 [shape = 'u8[512]{0}', space=vmem, size = 0x400, scoped, tag = 'output window, operand 0, single buffered']
    %11 = vsyncpa [#allocation4], 0
    %12 = vsyncpa [#allocation7], 0
    %13 = vsyncpa [#allocation5], 0
    // Predicated region
    $region2: #{reward_model_forward.1} parent=1 // pred_check
      _
    $region3: #{reward_model_forward.1} parent=1 // pred_check_branch
      %15 = sbr.rel (0) target = $region5
    $region4: #{reward_model_forward.1} parent=1 // pred_region
      %s17 = ssub.s32 256, 256
      %18 = vsyncadd [#allocation4], %s17
      %s20 = sshll.u32 [#allocation3], 4
      %s21 = int_to_ptr.vmem [resolvable:$true] %s20
      %23 = dma.hbm_to_vmem [thread:$0]  %s0, 256, %s21, [#allocation4]
    $region5: #{reward_model_forward.1} parent=1 // pred_fallthru
      _
    // Predicated region
    $region6: #{reward_model_forward.1} parent=1 // pred_check
      _
    $region7: #{reward_model_forward.1} parent=1 // pred_check_branch
      %25 = sbr.rel (0) target = $region9
    $region8: #{reward_model_forward.1} parent=1 // pred_region
      %s27 = ssub.s32 7424, 7424
      %28 = vsyncadd [#allocation7], %s27
      %s29 = sshll.u32 [#allocation6], 4
      %s30 = int_to_ptr.vmem [resolvable:$true] %s29
      %35 = dma.hbm_to_vmem [thread:$0]  %s1, 7424, %s30, [#allocation7], 256, 256, 16
    $region9: #{reward_model_forward.1} parent=1 // pred_fallthru
      _
    // Predicated region
    $region10: #{reward_model_forward.1} parent=1 // pred_check
      _
    $region11: #{reward_model_forward.1} parent=1 // pred_check_branch
      %37 = sbr.rel (0) target = $region13
    $region12: #{reward_model_forward.1} parent=1 // pred_region
      _
    $region13: #{reward_model_forward.1} parent=1 // pred_fallthru
      _
    // Predicated region
    $region14: #{reward_model_forward.1} parent=1 // pred_check
      _
    $region15: #{reward_model_forward.1} parent=1 // pred_check_branch
      %39 = sbr.rel (0) target = $region17
    $region16: #{reward_model_forward.1} parent=1 // pred_region
      _
    $region17: #{reward_model_forward.1} parent=1 // pred_fallthru
      _
    // Predicated region
    $region18: #{reward_model_forward.1} parent=1 // pred_check
      _
    $region19: #{reward_model_forward.1} parent=1 // pred_check_branch
      %41 = sbr.rel (0) target = $region21
    $region20: #{reward_model_forward.1} parent=1 // pred_region
      _
    $region21: #{reward_model_forward.1} parent=1 // pred_fallthru
      _
    // Predicated region
    $region22: #{reward_model_forward.1} parent=1 // pred_check
      _
    $region23: #{reward_model_forward.1} parent=1 // pred_check_branch
      %43 = sbr.rel (0) target = $region25
    $region24: #{reward_model_forward.1} parent=1 // pred_region
      %44 = dma.done [#allocation4], 256
    $region25: #{reward_model_forward.1} parent=1 // pred_fallthru
      _
    // Predicated region
    $region26: #{reward_model_forward.1} parent=1 // pred_check
      _
    $region27: #{reward_model_forward.1} parent=1 // pred_check_branch
      %46 = sbr.rel (0) target = $region29
    $region28: #{reward_model_forward.1} parent=1 // pred_region
      %47 = dma.done [#allocation7], 7424
    $region29: #{reward_model_forward.1} parent=1 // pred_fallthru
      _
    %v48 = vld [vmem:[#allocation3] sm:$0xff]
    %v49 = vld [vmem:[#allocation3 + $0x8] sm:$0xff]
    %v50 = vld [vmem:[#allocation6] sm:$0xff]
    %v51 = vld [vmem:[#allocation6 + $0x8] sm:$0xff]
    %v52 = vld [vmem:[#allocation6 + $0x10] sm:$0xff]
    %v53 = vld [vmem:[#allocation6 + $0x18] sm:$0xff]
    %v54 = vld [vmem:[#allocation6 + $0x20] sm:$0xff]
    %v55 = vld [vmem:[#allocation6 + $0x28] sm:$0xff]
    %v56 = vld [vmem:[#allocation6 + $0x30] sm:$0xff]
    %v57 = vld [vmem:[#allocation6 + $0x38] sm:$0xff]
    %v58 = vld [vmem:[#allocation6 + $0x40] sm:$0xff]
    %v59 = vld [vmem:[#allocation6 + $0x48] sm:$0xff]
    %v60 = vld [vmem:[#allocation6 + $0x50] sm:$0xff]
    %v61 = vld [vmem:[#allocation6 + $0x58] sm:$0xff]
    %v62 = vld [vmem:[#allocation6 + $0x60] sm:$0xff]
    %v63 = vld [vmem:[#allocation6 + $0x68] sm:$0xff]
    %v64 = vld [vmem:[#allocation6 + $0x70] sm:$0xff]
    %v65 = vld [vmem:[#allocation6 + $0x78] sm:$0xff]
    %v66 = vld [vmem:[#allocation6 + $0x80] sm:$0xff]
    %v67 = vld [vmem:[#allocation6 + $0x88] sm:$0xff]
    %v68 = vld [vmem:[#allocation6 + $0x90] sm:$0xff]
    %v69 = vld [vmem:[#allocation6 + $0x98] sm:$0xff]
    %v70 = vld [vmem:[#allocation6 + $0xa0] sm:$0xff]
    %v71 = vld [vmem:[#allocation6 + $0xa8] sm:$0xff]
    %v72 = vld [vmem:[#allocation6 + $0xb0] sm:$0xff]
    %v73 = vld [vmem:[#allocation6 + $0xb8] sm:$0xff]
    %v74 = vld [vmem:[#allocation6 + $0xc0] sm:$0xff]
    %v75 = vld [vmem:[#allocation6 + $0xc8] sm:$0xff]
    %v76 = vld [vmem:[#allocation6 + $0xd0] sm:$0xff]
    %v77 = vld [vmem:[#allocation6 + $0xd8] sm:$0xff]
    %v78 = vld [vmem:[#allocation6 + $0xe0] sm:$0xff]
    %v79 = vld [vmem:[#allocation6 + $0xe8] sm:$0xff]
    %v80 = vld [vmem:[#allocation6 + $0xf0] sm:$0xff]
    %v81 = vld [vmem:[#allocation6 + $0xf8] sm:$0xff]
    %v82 = vld [vmem:[#allocation6 + $0x100] sm:$0xff]
    %v83 = vld [vmem:[#allocation6 + $0x108] sm:$0xff]
    %v84 = vld [vmem:[#allocation6 + $0x110] sm:$0xff]
    %v85 = vld [vmem:[#allocation6 + $0x118] sm:$0xff]
    %v86 = vld [vmem:[#allocation6 + $0x120] sm:$0xff]
    %v87 = vld [vmem:[#allocation6 + $0x128] sm:$0xff]
    %v88 = vld [vmem:[#allocation6 + $0x130] sm:$0xff]
    %v89 = vld [vmem:[#allocation6 + $0x138] sm:$0xff]
    %v90 = vld [vmem:[#allocation6 + $0x140] sm:$0xff]
    %v91 = vld [vmem:[#allocation6 + $0x148] sm:$0xff]
    %v92 = vld [vmem:[#allocation6 + $0x150] sm:$0xff]
    %v93 = vld [vmem:[#allocation6 + $0x158] sm:$0xff]
    %v94 = vld [vmem:[#allocation6 + $0x160] sm:$0xff]
    %v95 = vld [vmem:[#allocation6 + $0x168] sm:$0xff]
    %v96 = vld [vmem:[#allocation6 + $0x170] sm:$0xff]
    %v97 = vld [vmem:[#allocation6 + $0x178] sm:$0xff]
    %v98 = vld [vmem:[#allocation6 + $0x180] sm:$0xff]
    %v99 = vld [vmem:[#allocation6 + $0x188] sm:$0xff]
    %v100 = vld [vmem:[#allocation6 + $0x190] sm:$0xff]
    %v101 = vld [vmem:[#allocation6 + $0x198] sm:$0xff]
    %v102 = vld [vmem:[#allocation6 + $0x1a0] sm:$0xff]
    %v103 = vld [vmem:[#allocation6 + $0x1a8] sm:$0xff]
    %v104 = vld [vmem:[#allocation6 + $0x1b0] sm:$0xff]
    %v105 = vld [vmem:[#allocation6 + $0x1b8] sm:$0xff]
    %v106 = vld [vmem:[#allocation6 + $0x1c0] sm:$0x3f]
    %v107 = vld [vmem:[#allocation6 + $0x1c8] sm:$0x3f]
    %v108 = vld [vmem:[%s2] sm:$0x3]
    %v110 = vlaneseq
    %v111 = vshrl.u32 %v110, 7
    %v112 = vsub.s32 0, %v111
    %v113 = vrot.slane %v108, %v112
    %v114 = vlaneseq
    %v115 = vshrl.u32 %v114, 7
    %v116 = vsub.s32 1, %v115
    %v117 = vrot.slane %v108, %v116
    %vm120 = vcmask 834560
    %v122 = vsel %vm120, %v49, 0
    %vm124 = vcmask 1045504
    %v126 = vsel %vm124, %v106, 0
    %v129 = vsel %vm124, %v107, 0
    %131 = vmatprep.subr.mxu0 %v51
    %132 = vmatpush1.msra.mxu0 %v50
    %133 = vmatprep.subr.mxu0 %v53
    %134 = vmatpush1.msra.mxu0 %v52
    %135 = vmatprep.subr.mxu0 %v55
    %136 = vmatpush1.msra.mxu0 %v54
    %137 = vmatprep.subr.mxu0 %v57
    %138 = vmatpush1.msra.mxu0 %v56
    %139 = vmatprep.subr.mxu0 %v59
    %140 = vmatpush1.msra.mxu0 %v58
    %141 = vmatprep.subr.mxu0 %v61
    %142 = vmatpush1.msra.mxu0 %v60
    %143 = vmatprep.subr.mxu0 %v63
    %144 = vmatpush1.msra.mxu0 %v62
    %145 = vmatprep.subr.mxu0 %v65
    %146 = vmatpush1.msra.mxu0 %v64
    %147 = vmatprep.subr.mxu0 %v67
    %148 = vmatpush1.msra.mxu0 %v66
    %149 = vmatprep.subr.mxu0 %v69
    %150 = vmatpush1.msra.mxu0 %v68
    %151 = vmatprep.subr.mxu0 %v71
    %152 = vmatpush1.msra.mxu0 %v70
    %153 = vmatprep.subr.mxu0 %v73
    %154 = vmatpush1.msra.mxu0 %v72
    %155 = vmatprep.subr.mxu0 %v75
    %156 = vmatpush1.msra.mxu0 %v74
    %157 = vmatprep.subr.mxu0 %v77
    %158 = vmatpush1.msra.mxu0 %v76
    %159 = vmatprep.subr.mxu0 %v79
    %160 = vmatpush1.msra.mxu0 %v78
    %161 = vmatprep.subr.mxu0 %v81
    %162 = vmatpush1.msra.mxu0 %v80
    %163 = vmatprep.subr.mxu0 %v83
    %164 = vmatpush1.msra.mxu0 %v82
    %165 = vmatprep.subr.mxu0 %v85
    %166 = vmatpush1.msra.mxu0 %v84
    %167 = vmatprep.subr.mxu0 %v87
    %168 = vmatpush1.msra.mxu0 %v86
    %169 = vmatprep.subr.mxu0 %v89
    %170 = vmatpush1.msra.mxu0 %v88
    %171 = vmatprep.subr.mxu0 %v91
    %172 = vmatpush1.msra.mxu0 %v90
    %173 = vmatprep.subr.mxu0 %v93
    %174 = vmatpush1.msra.mxu0 %v92
    %175 = vmatprep.subr.mxu0 %v95
    %176 = vmatpush1.msra.mxu0 %v94
    %177 = vmatprep.subr.mxu0 %v97
    %178 = vmatpush1.msra.mxu0 %v96
    %179 = vmatprep.subr.mxu0 %v99
    %180 = vmatpush1.msra.mxu0 %v98
    %181 = vmatprep.subr.mxu0 %v101
    %182 = vmatpush1.msra.mxu0 %v100
    %183 = vmatprep.subr.mxu0 %v103
    %184 = vmatpush1.msra.mxu0 %v102
    %185 = vmatprep.subr.mxu0 %v105
    %186 = vmatpush1.msra.mxu0 %v104
    %187 = vmatprep.subr.mxu0 %v129
    %188 = vmatpush1.msra.mxu0 %v126
    %189 = vmatprep.subr.mxu0 0.0
    %190 = vmatpush1.msra.mxu0 0.0
    %191 = vmatprep.subr.mxu0 0.0
    %192 = vmatpush1.msra.mxu0 0.0
    %193 = vmatprep.subr.mxu0 0.0
    %194 = vmatpush1.msra.mxu0 0.0
    %195 = vmatprep.mubr.f32.mxu0 %v122
    %196 = vmatmul.mubr.f32.gmra.mrb[0].mxu0 %v48
    %v197 = vpop.f32.mrb[0].mxu0
    %v198 = vadd.f32 %v113, %v197
    %v199 = vpop.f32.mrb[0].mxu0
    %v200 = vadd.f32 %v117, %v199
    %201 = vdwg.mxu0
    %v202 = vmax.f32 %v198, 0.0
    %v203 = vmax.f32 %v200, 0.0
    %v204 = vld [vmem:[%s3] sm:$0x3]
    %v206 = vlaneseq
    %v207 = vshrl.u32 %v206, 7
    %v208 = vsub.s32 0, %v207
    %v209 = vrot.slane %v204, %v208
    %v210 = vlaneseq
    %v211 = vshrl.u32 %v210, 7
    %v212 = vsub.s32 1, %v211
    %v213 = vrot.slane %v204, %v212
    %v216 = vmul.f32 %v202, %v209
    %v217 = vmul.f32 %v203, %v213
    %v218 = vadd.f32 %v216, %v217
    %219 = vadd.xlane.f32.xlu0 %v218
    %v220 = vpop.xlane.xlu0 %219
    %s221 = sld [smem:[#allocation2]]
    %v222 = vstv %s221
    %v223 = vadd.f32 %v220, %v222
    %v225 = vlaneseq
    %v226 = vand.u32 %v225, 127
    %v227 = vlaneseq
    %v228 = vshrl.u32 %v227, 7
    %v229 = vsub.s32 %v226, %v228
    %v230 = vrot.slane %v223, %v229
    %vm232 = vcmask 57344
    %233 = vst.msk [vmem:[#allocation8] sm:$0x1] %vm232, %v230
    // Predicated region
    $region30: #{reward_model_forward.1} parent=1 // pred_check
      _
    $region31: #{reward_model_forward.1} parent=1 // pred_check_branch
      %235 = sbr.rel (0) target = $region33
    $region32: #{reward_model_forward.1} parent=1 // pred_region
      %s237 = ssub.s32 16, 16
      %238 = vsyncadd [#allocation5], %s237
      %s240 = sshll.u32 [#allocation8], 4
      %s241 = int_to_ptr.vmem [resolvable:$true] %s240
      %243 = dma.vmem_to_hbm [thread:$0]  %s241, 16, %s5, [#allocation5]
    $region33: #{reward_model_forward.1} parent=1 // pred_fallthru
      _
    // Predicated region
    $region34: #{reward_model_forward.1} parent=1 // pred_check
      _
    $region35: #{reward_model_forward.1} parent=1 // pred_check_branch
      %245 = sbr.rel (0) target = $region37
    $region36: #{reward_model_forward.1} parent=1 // pred_region
      %246 = dma.done [#allocation5], 16
    $region37: #{reward_model_forward.1} parent=1 // pred_fallthru
      _
    %247 = vsyncpa [#allocation4], 1
    %248 = vsyncpa [#allocation7], 1
    %249 = vsyncpa [#allocation5], 1

</llo_original>
